<compile_context>
chip_gen: v5e
topology: v5e:2x2
jax: 0.10.0
libtpu: 0.0.40
codegen_flags: <defaults>
</compile_context>

<pallas_src>
import functools

import jax
import jax.numpy as jnp
from jax.experimental import pallas as pl
from jax.experimental.pallas import tpu as pltpu


EXPANSION = 4
BN_EPS = 1e-5


def _vmem_limit_bytes():
    try:
        cap = pltpu.get_tpu_info().vmem_capacity_bytes
    except Exception:
        cap = 64 * 1024 * 1024          # conservative: v7x physical VMEM
    return int(min(cap * 3 // 4, 100 * 1024 * 1024))


def _pick_tile(dim, candidates):
    """Largest preferred tile that divides dim, with a VMEM-safe fallback."""
    for c in candidates:
        if dim % c == 0:
            return c
    if dim <= max(candidates):
        return dim
    for c in range(max(candidates), 0, -1):
        if dim % c == 0:
            return c
    return dim


def _pick_row_block(n_batch, h_out, w_out, target_m=512):
    """Output rows per tail grid step so that TH*W_out ~ target_m MXU rows."""
    target_rows = max(1, -(-target_m // max(w_out, 1)))
    th = 1
    for cand in range(1, h_out + 1):
        if h_out % cand == 0 and cand <= target_rows:
            th = cand
    # Keep at least 2 grid steps so both v7x TensorCores get work.
    if n_batch * (h_out // th) < 2:
        for cand in range(th - 1, 0, -1):
            if h_out % cand == 0:
                th = cand
                break
    return th


# ---------------------------------------------------------------------------
# Kernel 1: tiled 1x1-conv matmul with folded BN (+ optional ReLU)
# ---------------------------------------------------------------------------

def _mm_affine_kernel(x_ref, w_ref, s_ref, b_ref, o_ref, *, relu):
    y = jnp.dot(x_ref[...], w_ref[...], preferred_element_type=jnp.float32)
    y = y * s_ref[...] + b_ref[...]
    if relu:
        y = jnp.maximum(y, 0.0)
    o_ref[...] = y.astype(o_ref.dtype)


def matmul_affine(x, w, scale, bias, *, relu, out_dtype=jnp.bfloat16):
    m, k = x.shape
    n = w.shape[1]
    tm = _pick_tile(m, (512, 1024, 256, 128))
    tn = _pick_tile(n, (256, 512, 128))
    # NOTE: no K grid axis — K <= 2048 for ResNet bottlenecks, so a full-K
    # bf16 block fits VMEM; add a K axis + f32 VMEM accumulator if K grows.
    return pl.pallas_call(
        functools.partial(_mm_affine_kernel, relu=relu),
        out_shape=jax.ShapeDtypeStruct((m, n), out_dtype),
        grid=(m // tm, n // tn),
        in_specs=[
            pl.BlockSpec((tm, k), lambda i, j: (i, 0)),
            pl.BlockSpec((k, tn), lambda i, j: (0, j)),
            pl.BlockSpec((1, tn), lambda i, j: (0, j)),
            pl.BlockSpec((1, tn), lambda i, j: (0, j)),
        ],
        out_specs=pl.BlockSpec((tm, tn), lambda i, j: (i, j)),
        compiler_params=pltpu.CompilerParams(
            dimension_semantics=("parallel", "parallel"),
            vmem_limit_bytes=_vmem_limit_bytes()),
    )(x, w, scale, bias)


# ---------------------------------------------------------------------------
# Kernel 2: fused 3x3 conv (stride folded) + bn2 + relu + conv3 (1x1) + bn3
#           + shortcut (projection or identity) + add + relu.
#           Grid = (N, H_out // TH); TH output rows per step.
# ---------------------------------------------------------------------------

def _parity_regroup(x, axis, stride):
    """Group positions along `axis` by (index % stride).  After this, every
    3x3-tap read for a strided output tile is a contiguous unit-stride slice
    (no strided in-kernel loads, no selection matmuls, no wasted compute)."""
    if stride == 1:
        return x, [0]
    parts = [jax.lax.slice_in_dim(x, g, x.shape[axis], stride=stride, axis=axis)
             for g in range(stride)]
    offs = [0]
    for p in parts[:-1]:
        offs.append(offs[-1] + p.shape[axis])
    return jnp.concatenate(parts, axis=axis), offs


def _bottleneck_tail_kernel(*refs, th, roff, coff, has_proj):
    if has_proj:
        (y1_ref, sc_ref, w2_ref, s2_ref, b2_ref,
         w3_ref, s3_ref, b3_ref, wsc_ref, ssc_ref, bsc_ref, o_ref) = refs
    else:
        (y1_ref, sc_ref, w2_ref, s2_ref, b2_ref,
         w3_ref, s3_ref, b3_ref, o_ref) = refs

    _, w_out, co = o_ref.shape
    c = y1_ref.shape[-1]
    c_sc = sc_ref.shape[-1]
    m = th * w_out
    row_base = pl.program_id(1) * th

    # Build the im2col slab once per row block: 9 contiguous (TH, W_out, C)
    # patches of the padded + parity-regrouped y1 image, concatenated along
    # channels -> one big (M, 9C) MXU operand.  No boundary masks needed
    # (zero padding was done in HBM on the tiny y1 tensor).
    patches = []
    for dy in range(3):
        for dx in range(3):
            patches.append(y1_ref[pl.ds(row_base + roff[dy], th),
                                  pl.ds(coff[dx], w_out), :])
    slab = jnp.concatenate(patches, axis=-1).reshape(m, 9 * c)

    # conv2 (3x3) as ONE large-K matmul, then bn2 + relu in f32.
    y2 = jnp.dot(slab, w2_ref[...], preferred_element_type=jnp.float32)
    y2 = jnp.maximum(y2 * s2_ref[...] + b2_ref[...], 0.0)

    # conv3 (1x1) + bn3.
    y3 = jnp.dot(y2.astype(jnp.bfloat16), w3_ref[...],
                 preferred_element_type=jnp.float32)
    y3 = y3 * s3_ref[...] + b3_ref[...]

    # Shortcut: projection 1x1 conv + bn, or identity.
    sc = sc_ref[...].reshape(m, c_sc)
    if has_proj:
        sc = jnp.dot(sc, wsc_ref[...], preferred_element_type=jnp.float32)
        sc = sc * ssc_ref[...] + bsc_ref[...]
    else:
        sc = sc.astype(jnp.float32)

    out = jnp.maximum(y3 + sc, 0.0)
    o_ref[...] = out.reshape(th, w_out, co).astype(o_ref.dtype)


def bottleneck_tail(y1, pp, sc_in, *, stride, has_proj):
    n, h_in, w_in, c = y1.shape
    co = pp["w3"].shape[1]
    h_out = (h_in - 1) // stride + 1
    w_out = (w_in - 1) // stride + 1
    c_sc = sc_in.shape[-1]

    # Zero-pad (conv padding = 1) and regroup rows/cols by parity (stride > 1)
    # so all in-kernel tap reads are contiguous.  y1 has only `planes`
    # channels, so this padded copy is tiny.
    y1p = jnp.pad(y1, ((0, 0), (1, 1), (1, 1), (0, 0)))
    y1r, row_off = _parity_regroup(y1p, axis=1, stride=stride)
    y1r, col_off = _parity_regroup(y1r, axis=2, stride=stride)
    h_pad, w_pad = y1r.shape[1], y1r.shape[2]
    roff = tuple(row_off[dy % stride] + dy // stride for dy in range(3))
    coff = tuple(col_off[dx % stride] + dx // stride for dx in range(3))

    th = _pick_row_block(n, h_out, w_out)
    grid = (n, h_out // th)

    # Whole-array VMEM operands: weights / folded-BN vectors are placed in
    # VMEM once (single copy, not part of the double-buffered pipeline).
    vmem_spec = pl.BlockSpec(memory_space=pltpu.MemorySpace.VMEM)
    in_specs = [
        # Full y1 image of one batch element: fetched once per n (constant
        # index along the row-block axis), reused by all row blocks.
        pl.BlockSpec((None, h_pad, w_pad, c), lambda nn, hb: (nn, 0, 0, 0)),
        pl.BlockSpec((None, th, w_out, c_sc), lambda nn, hb: (nn, hb, 0, 0)),
        vmem_spec, vmem_spec, vmem_spec,      # w2 (im2col), s2, b2
        vmem_spec, vmem_spec, vmem_spec,      # w3, s3, b3
    ]
    args = [y1r, sc_in, pp["w2col"], pp["s2"], pp["b2"],
            pp["w3"], pp["s3"], pp["b3"]]
    if has_proj:
        in_specs += [vmem_spec, vmem_spec, vmem_spec]
        args += [pp["wsc"], pp["ssc"], pp["bsc"]]

    kern = functools.partial(_bottleneck_tail_kernel, th=th, roff=roff,
                             coff=coff, has_proj=has_proj)
    return pl.pallas_call(
        kern,
        out_shape=jax.ShapeDtypeStruct((n, h_out, w_out, co), jnp.bfloat16),
        grid=grid,
        in_specs=in_specs,
        out_specs=pl.BlockSpec((None, th, w_out, co),
                               lambda nn, hb: (nn, hb, 0, 0)),
        compiler_params=pltpu.CompilerParams(
            dimension_semantics=("parallel", "parallel"),
            vmem_limit_bytes=_vmem_limit_bytes()),
    )(*args)


# ---------------------------------------------------------------------------
# Bottleneck block: parameters, one-time preparation, forward
# ---------------------------------------------------------------------------

def fold_bn(gamma, beta, mean, var):
    scale = gamma / jnp.sqrt(var + BN_EPS)
    bias = beta - mean * scale
    return scale.astype(jnp.float32), bias.astype(jnp.float32)


def init_bottleneck_params(key, in_planes, planes):
    out_planes = EXPANSION * planes
    ks = jax.random.split(key, 8)

    def w(k, shape):
        return (0.1 * jax.random.normal(k, shape)).astype(jnp.float32)

    def bn(k, ch):
        k1, k2, k3, k4 = jax.random.split(k, 4)
        gamma = 1.0 + 0.1 * jax.random.normal(k1, (ch,))
        beta = 0.1 * jax.random.normal(k2, (ch,))
        mean = 0.1 * jax.random.normal(k3, (ch,))
        var = 1.0 + 0.1 * jax.random.uniform(k4, (ch,))
        return fold_bn(gamma, beta, mean, var)

    return {
        "w1": w(ks[0], (in_planes, planes)),          # 1x1: (Cin, Cout)
        "w2": w(ks[1], (3, 3, planes, planes)),       # 3x3: (kh, kw, Cin, Cout)
        "w3": w(ks[2], (planes, out_planes)),         # 1x1
        "bn1": bn(ks[3], planes),
        "bn2": bn(ks[4], planes),
        "bn3": bn(ks[5], out_planes),
        "wsc": w(ks[6], (in_planes, out_planes)),     # shortcut 1x1
        "bnsc": bn(ks[7], out_planes),
    }


def prepare_bottleneck_params(params):
    """One-time bf16 weight casts / im2col weight layout / BN folding reshape
    (kept out of the per-call forward path)."""
    planes = params["w1"].shape[1]
    out_planes = params["w3"].shape[1]
    s1, b1 = params["bn1"]
    s2, b2 = params["bn2"]
    s3, b3 = params["bn3"]
    ssc, bsc = params["bnsc"]
    return {
        "planes": planes,
        "out_planes": out_planes,
        "w1": params["w1"].astype(jnp.bfloat16),
        "s1": s1.reshape(1, -1).astype(jnp.float32),
        "b1": b1.reshape(1, -1).astype(jnp.float32),
        # (3,3,Cin,Cout) -> (9*Cin, Cout), tap order (dy, dx) matching the
        # in-kernel im2col slab concatenation.
        "w2col": params["w2"].reshape(9 * planes, planes).astype(jnp.bfloat16),
        "s2": s2.reshape(1, -1).astype(jnp.float32),
        "b2": b2.reshape(1, -1).astype(jnp.float32),
        "w3": params["w3"].astype(jnp.bfloat16),
        "s3": s3.reshape(1, -1).astype(jnp.float32),
        "b3": b3.reshape(1, -1).astype(jnp.float32),
        "wsc": params["wsc"].astype(jnp.bfloat16),
        "ssc": ssc.reshape(1, -1).astype(jnp.float32),
        "bsc": bsc.reshape(1, -1).astype(jnp.float32),
    }


def bottleneck_forward(prep, x_nchw, stride=1):
    # NCHW <-> NHWC transposes only at the module boundary (PyTorch interface);
    # chained blocks should stay NHWC (bf16) end-to-end.
    n, cin, h, w = x_nchw.shape
    x = jnp.transpose(x_nchw, (0, 2, 3, 1)).astype(jnp.float32)    # NHWC
    x_bf = x.astype(jnp.bfloat16)

    planes = prep["planes"]
    out_planes = prep["out_planes"]

    # conv1 (1x1) + bn1 + relu — tiled bf16 matmul, bf16 activations out.
    y1 = matmul_affine(x_bf.reshape(n * h * w, cin), prep["w1"],
                       prep["s1"], prep["b1"], relu=True,
                       out_dtype=jnp.bfloat16).reshape(n, h, w, planes)

    has_proj = (stride != 1) or (cin != out_planes)
    if has_proj:
        sc_in = x_bf if stride == 1 else x_bf[:, ::stride, ::stride, :]
    else:
        sc_in = x                                     # identity residual (f32)

    out = bottleneck_tail(y1, prep, sc_in, stride=stride, has_proj=has_proj)
    return jnp.transpose(out, (0, 3, 1, 2))           # NCHW, bfloat16


# ---------------------------------------------------------------------------
# Pure-JAX reference (models the kernels' bf16-operand / f32-accumulate math)
# ---------------------------------------------------------------------------

def bottleneck_reference(params, x_nchw, stride=1):
    prec = jax.lax.Precision.HIGHEST
    bf = lambda a: a.astype(jnp.bfloat16).astype(jnp.float32)
    x = jnp.transpose(x_nchw, (0, 2, 3, 1)).astype(jnp.float32)
    cin = x.shape[-1]
    out_planes = params["w3"].shape[1]

    def affine(y, sb):
        s, b = sb
        return y * s + b

    y1 = jax.nn.relu(affine(
        jnp.einsum("nhwc,co->nhwo", bf(x), bf(params["w1"]), precision=prec),
        params["bn1"]))
    y1 = bf(y1)  # kernel stores y1 in bf16
    y2 = jax.lax.conv_general_dilated(
        y1, bf(params["w2"]), window_strides=(stride, stride),
        padding=((1, 1), (1, 1)),
        dimension_numbers=("NHWC", "HWIO", "NHWC"), precision=prec)
    y2 = jax.nn.relu(affine(y2, params["bn2"]))
    y2 = bf(y2)  # kernel feeds conv3 with bf16
    y3 = affine(
        jnp.einsum("nhwc,co->nhwo", y2, bf(params["w3"]), precision=prec),
        params["bn3"])
    if stride != 1 or cin != out_planes:
        xs = bf(x[:, ::stride, ::stride, :])
        sc = affine(
            jnp.einsum("nhwc,co->nhwo", xs, bf(params["wsc"]), precision=prec),
            params["bnsc"])
    else:
        sc = x
    out = jax.nn.relu(y3 + sc)
    return jnp.transpose(out, (0, 3, 1, 2))


# ---------------------------------------------------------------------------

if __name__ == "__main__":
    key = jax.random.PRNGKey(0)
    kx1, kx2, kp1, kp2 = jax.random.split(key, 4)

    # Case 1: projection shortcut (in_planes != 4*planes), stride=1.
    in_planes, planes = 4, 4
    x1 = jax.random.normal(kx1, (2, in_planes, 16, 16), dtype=jnp.float32)
    p1 = init_bottleneck_params(kp1, in_planes, planes)
    prep1 = prepare_bottleneck_params(p1)
    out1 = jax.block_until_ready(bottleneck_forward(prep1, x1, stride=1))
    ref1 = bottleneck_reference(p1, x1, stride=1)
    assert out1.shape == (2, EXPANSION * planes, 16, 16), out1.shape
    assert jnp.allclose(out1.astype(jnp.float32), ref1, rtol=1e-2, atol=1e-2), \
        float(jnp.max(jnp.abs(out1.astype(jnp.float32) - ref1)))

    # Case 2: strided block (stride=2, projection shortcut).
    out2 = jax.block_until_ready(bottleneck_forward(prep1, x1, stride=2))
    ref2 = bottleneck_reference(p1, x1, stride=2)
    assert out2.shape == (2, EXPANSION * planes, 8, 8), out2.shape
    assert jnp.allclose(out2.astype(jnp.float32), ref2, rtol=1e-2, atol=1e-2), \
        float(jnp.max(jnp.abs(out2.astype(jnp.float32) - ref2)))

    # Case 3: identity shortcut (in_planes == 4*planes), stride=1.
    in_planes3, planes3 = 16, 4
    x3 = jax.random.normal(kx2, (2, in_planes3, 16, 16), dtype=jnp.float32)
    p3 = init_bottleneck_params(kp2, in_planes3, planes3)
    prep3 = prepare_bottleneck_params(p3)
    out3 = jax.block_until_ready(bottleneck_forward(prep3, x3, stride=1))
    ref3 = bottleneck_reference(p3, x3, stride=1)
    assert out3.shape == (2, EXPANSION * planes3, 16, 16), out3.shape
    assert jnp.allclose(out3.astype(jnp.float32), ref3, rtol=1e-2, atol=1e-2), \
        float(jnp.max(jnp.abs(out3.astype(jnp.float32) - ref3)))

    print("KERNEL_OK")
</pallas_src>

<mosaic_0001>
module attributes {stable_mosaic.version = 11 : i64} {
  func.func @_mm_affine_kernel(%arg0: i32, %arg1: i32, %arg2: memref<512x4xbf16, #tpu.memory_space<vmem>>, %arg3: memref<4x4xbf16, #tpu.memory_space<vmem>>, %arg4: memref<1x4xf32, #tpu.memory_space<vmem>>, %arg5: memref<1x4xf32, #tpu.memory_space<vmem>>, %arg6: memref<512x4xbf16, #tpu.memory_space<vmem>>) attributes {dimension_semantics = [#tpu.dimension_semantics<parallel>, #tpu.dimension_semantics<parallel>], iteration_bounds = array<i64: 1, 1>, scalar_prefetch = 0 : i64, scratch_operands = 0 : i64, tpu.core_type = #tpu.core_type<tc>, window_params = [{transform_indices = @transform_0, window_bounds = array<i64: 512, 4>}, {transform_indices = @transform_1, window_bounds = array<i64: 4, 4>}, {transform_indices = @transform_2, window_bounds = array<i64: 1, 4>}, {transform_indices = @transform_3, window_bounds = array<i64: 1, 4>}, {transform_indices = @transform_4, window_bounds = array<i64: 512, 4>}]} {
    %c0 = arith.constant 0 : index
    %c0_0 = arith.constant 0 : index
    %0 = vector.load %arg2[%c0, %c0_0] : memref<512x4xbf16, #tpu.memory_space<vmem>>, vector<512x4xbf16>
    %c0_1 = arith.constant 0 : index
    %c0_2 = arith.constant 0 : index
    %1 = vector.load %arg3[%c0_1, %c0_2] : memref<4x4xbf16, #tpu.memory_space<vmem>>, vector<4x4xbf16>
    %cst = arith.constant dense<0.000000e+00> : vector<512x4xf32>
    %2 = tpu.matmul %0, %1, %cst {dimension_numbers = #tpu.dot_dimension_numbers<[1], [0], [0], [1], [0, 0, 1, 1], [], []>} : vector<512x4xbf16>, vector<4x4xbf16>, vector<512x4xf32> -> vector<512x4xf32>
    %c0_3 = arith.constant 0 : index
    %c0_4 = arith.constant 0 : index
    %3 = vector.load %arg4[%c0_3, %c0_4] : memref<1x4xf32, #tpu.memory_space<vmem>>, vector<1x4xf32>
    %4 = vector.broadcast %3 : vector<1x4xf32> to vector<512x4xf32>
    %5 = arith.mulf %2, %4 : vector<512x4xf32>
    %c0_5 = arith.constant 0 : index
    %c0_6 = arith.constant 0 : index
    %6 = vector.load %arg5[%c0_5, %c0_6] : memref<1x4xf32, #tpu.memory_space<vmem>>, vector<1x4xf32>
    %7 = vector.broadcast %6 : vector<1x4xf32> to vector<512x4xf32>
    %8 = arith.addf %5, %7 : vector<512x4xf32>
    %cst_7 = arith.constant 0.000000e+00 : f32
    %9 = vector.broadcast %cst_7 : f32 to vector<512x4xf32>
    %10 = arith.maximumf %8, %9 : vector<512x4xf32>
    %11 = arith.truncf %10 : vector<512x4xf32> to vector<512x4xbf16>
    %c0_8 = arith.constant 0 : index
    %c0_9 = arith.constant 0 : index
    %12 = vector.load %arg6[%c0_8, %c0_9] : memref<512x4xbf16, #tpu.memory_space<vmem>>, vector<512x4xbf16>
    tpu.vector_store %arg6[%c0_8, %c0_9], %11 {strides = array<i32>} : memref<512x4xbf16, #tpu.memory_space<vmem>>, vector<512x4xbf16>,
    return
  }
  func.func @transform_0(%arg0: i32, %arg1: i32) -> (i32, i32) {
    %c0_i32 = arith.constant 0 : i32
    %c0_i32_0 = arith.constant 0 : i32
    return %arg0, %c0_i32 : i32, i32
  }
  func.func @transform_1(%arg0: i32, %arg1: i32) -> (i32, i32) {
    %c0_i32 = arith.constant 0 : i32
    %c0_i32_0 = arith.constant 0 : i32
    return %c0_i32, %arg1 : i32, i32
  }
  func.func @transform_2(%arg0: i32, %arg1: i32) -> (i32, i32) {
    %c0_i32 = arith.constant 0 : i32
    %c0_i32_0 = arith.constant 0 : i32
    return %c0_i32, %arg1 : i32, i32
  }
  func.func @transform_3(%arg0: i32, %arg1: i32) -> (i32, i32) {
    %c0_i32 = arith.constant 0 : i32
    %c0_i32_0 = arith.constant 0 : i32
    return %c0_i32, %arg1 : i32, i32
  }
  func.func @transform_4(%arg0: i32, %arg1: i32) -> (i32, i32) {
    %c0_i32 = arith.constant 0 : i32
    return %arg0, %arg1 : i32, i32
  }
}

</mosaic_0001>

<llo_original>
// kernel: tpu_custom_call.1
$region0: #{tpu_custom_call.1}
  #allocation0 [shape = 'u32[]', space=smem, size = 0x4, offset = 0x4, fixed_abs, tag = 'smem constant byte address 0x4 - core index']
  #allocation1 [shape = 'u32[72,128]{1,0:T(1,128)}', space=vmem, size = 0x9000, scoped, tag = 'internal scratch']
  %s0 = inlined_call_operand.vmem [shape: bf16[512,4], index: 0, kind: input, shape index: {}]
  %s1 = inlined_call_operand.vmem [shape: bf16[4,4], index: 1, kind: input, shape index: {}]
  %s2 = inlined_call_operand.vmem [shape: f32[1,4], index: 2, kind: input, shape index: {}]
  %s3 = inlined_call_operand.vmem [shape: f32[1,4], index: 3, kind: input, shape index: {}]
  %s4 = inlined_call_operand.vmem [shape: bf16[512,4], index: 4, kind: output, shape index: {}]
  %s5 = sld [smem:[#allocation0]]
  $region26: #{tpu_custom_call.1} parent=0
    _
  %s7 = ssub.s32 1, %s5
  %s8 = scalar_select 0, %s7, %s5
  // Predicated region
  $region2: #{tpu_custom_call.1} parent=0 // pred_check
    _
  $region3: #{tpu_custom_call.1} parent=0 // pred_check_branch
    %10 = sbr.rel (0) target = $region5
  $region4: #{tpu_custom_call.1} parent=0 // pred_region
    _
  $region5: #{tpu_custom_call.1} parent=0 // pred_fallthru
    _
  // Predicated region
  $region6: #{tpu_custom_call.1} parent=0 // pred_check
    _
  $region7: #{tpu_custom_call.1} parent=0 // pred_check_branch
    %12 = sbr.rel (0) target = $region9
  $region8: #{tpu_custom_call.1} parent=0 // pred_region
    _
  $region9: #{tpu_custom_call.1} parent=0 // pred_fallthru
    _
  // Predicated region
  $region10: #{tpu_custom_call.1} parent=0 // pred_check
    _
  $region11: #{tpu_custom_call.1} parent=0 // pred_check_branch
    %14 = sbr.rel (0) target = $region13
  $region12: #{tpu_custom_call.1} parent=0 // pred_region
    _
  $region13: #{tpu_custom_call.1} parent=0 // pred_fallthru
    _
  // Predicated region
  $region14: #{tpu_custom_call.1} parent=0 // pred_check
    _
  $region15: #{tpu_custom_call.1} parent=0 // pred_check_branch
    %16 = sbr.rel (0) target = $region17
  $region16: #{tpu_custom_call.1} parent=0 // pred_region
    _
  $region17: #{tpu_custom_call.1} parent=0 // pred_fallthru
    _
  %v18 = vld [vmem:[%s0] sm:$0xf]
  %v19 = vld [vmem:[%s0 + $0x4] sm:$0xf]
  %v20 = vld [vmem:[%s0 + $0x8] sm:$0xf]
  %v21 = vld [vmem:[%s0 + $0xc] sm:$0xf]
  %v22 = vld [vmem:[%s0 + $0x10] sm:$0xf]
  %v23 = vld [vmem:[%s0 + $0x14] sm:$0xf]
  %v24 = vld [vmem:[%s0 + $0x18] sm:$0xf]
  %v25 = vld [vmem:[%s0 + $0x1c] sm:$0xf]
  %v26 = vld [vmem:[%s0 + $0x20] sm:$0xf]
  %v27 = vld [vmem:[%s0 + $0x24] sm:$0xf]
  %v28 = vld [vmem:[%s0 + $0x28] sm:$0xf]
  %v29 = vld [vmem:[%s0 + $0x2c] sm:$0xf]
  %v30 = vld [vmem:[%s0 + $0x30] sm:$0xf]
  %v31 = vld [vmem:[%s0 + $0x34] sm:$0xf]
  %v32 = vld [vmem:[%s0 + $0x38] sm:$0xf]
  %v33 = vld [vmem:[%s0 + $0x3c] sm:$0xf]
  %v34 = vld [vmem:[%s0 + $0x40] sm:$0xf]
  %v35 = vld [vmem:[%s0 + $0x44] sm:$0xf]
  %v36 = vld [vmem:[%s0 + $0x48] sm:$0xf]
  %v37 = vld [vmem:[%s0 + $0x4c] sm:$0xf]
  %v38 = vld [vmem:[%s0 + $0x50] sm:$0xf]
  %v39 = vld [vmem:[%s0 + $0x54] sm:$0xf]
  %v40 = vld [vmem:[%s0 + $0x58] sm:$0xf]
  %v41 = vld [vmem:[%s0 + $0x5c] sm:$0xf]
  %v42 = vld [vmem:[%s0 + $0x60] sm:$0xf]
  %v43 = vld [vmem:[%s0 + $0x64] sm:$0xf]
  %v44 = vld [vmem:[%s0 + $0x68] sm:$0xf]
  %v45 = vld [vmem:[%s0 + $0x6c] sm:$0xf]
  %v46 = vld [vmem:[%s0 + $0x70] sm:$0xf]
  %v47 = vld [vmem:[%s0 + $0x74] sm:$0xf]
  %v48 = vld [vmem:[%s0 + $0x78] sm:$0xf]
  %v49 = vld [vmem:[%s0 + $0x7c] sm:$0xf]
  %v50 = vld [vmem:[%s0 + $0x80] sm:$0xf]
  %v51 = vld [vmem:[%s0 + $0x84] sm:$0xf]
  %v52 = vld [vmem:[%s0 + $0x88] sm:$0xf]
  %v53 = vld [vmem:[%s0 + $0x8c] sm:$0xf]
  %v54 = vld [vmem:[%s0 + $0x90] sm:$0xf]
  %v55 = vld [vmem:[%s0 + $0x94] sm:$0xf]
  %v56 = vld [vmem:[%s0 + $0x98] sm:$0xf]
  %v57 = vld [vmem:[%s0 + $0x9c] sm:$0xf]
  %v58 = vld [vmem:[%s0 + $0xa0] sm:$0xf]
  %v59 = vld [vmem:[%s0 + $0xa4] sm:$0xf]
  %v60 = vld [vmem:[%s0 + $0xa8] sm:$0xf]
  %v61 = vld [vmem:[%s0 + $0xac] sm:$0xf]
  %v62 = vld [vmem:[%s0 + $0xb0] sm:$0xf]
  %v63 = vld [vmem:[%s0 + $0xb4] sm:$0xf]
  %v64 = vld [vmem:[%s0 + $0xb8] sm:$0xf]
  %v65 = vld [vmem:[%s0 + $0xbc] sm:$0xf]
  %v66 = vld [vmem:[%s0 + $0xc0] sm:$0xf]
  %v67 = vld [vmem:[%s0 + $0xc4] sm:$0xf]
  %v68 = vld [vmem:[%s0 + $0xc8] sm:$0xf]
  %v69 = vld [vmem:[%s0 + $0xcc] sm:$0xf]
  %v70 = vld [vmem:[%s0 + $0xd0] sm:$0xf]
  %v71 = vld [vmem:[%s0 + $0xd4] sm:$0xf]
  %v72 = vld [vmem:[%s0 + $0xd8] sm:$0xf]
  %v73 = vld [vmem:[%s0 + $0xdc] sm:$0xf]
  %v74 = vld [vmem:[%s0 + $0xe0] sm:$0xf]
  %v75 = vld [vmem:[%s0 + $0xe4] sm:$0xf]
  %v76 = vld [vmem:[%s0 + $0xe8] sm:$0xf]
  %v77 = vld [vmem:[%s0 + $0xec] sm:$0xf]
  %v78 = vld [vmem:[%s0 + $0xf0] sm:$0xf]
  %v79 = vld [vmem:[%s0 + $0xf4] sm:$0xf]
  %v80 = vld [vmem:[%s0 + $0xf8] sm:$0xf]
  %v81 = vld [vmem:[%s0 + $0xfc] sm:$0xf]
  %v82 = vld [vmem:[%s1] sm:$0x3]
  %v147 = vunpack.c.l.b16 %v18
  %v148 = vunpack.c.l.b16 %v19
  %v149 = vunpack.c.l.b16 %v20
  %v150 = vunpack.c.l.b16 %v21
  %v151 = vunpack.c.l.b16 %v22
  %v152 = vunpack.c.l.b16 %v23
  %v153 = vunpack.c.l.b16 %v24
  %v154 = vunpack.c.l.b16 %v25
  %v155 = vunpack.c.l.b16 %v26
  %v156 = vunpack.c.l.b16 %v27
  %v157 = vunpack.c.l.b16 %v28
  %v158 = vunpack.c.l.b16 %v29
  %v159 = vunpack.c.l.b16 %v30
  %v160 = vunpack.c.l.b16 %v31
  %v161 = vunpack.c.l.b16 %v32
  %v162 = vunpack.c.l.b16 %v33
  %v163 = vunpack.c.l.b16 %v34
  %v164 = vunpack.c.l.b16 %v35
  %v165 = vunpack.c.l.b16 %v36
  %v166 = vunpack.c.l.b16 %v37
  %v167 = vunpack.c.l.b16 %v38
  %v168 = vunpack.c.l.b16 %v39
  %v169 = vunpack.c.l.b16 %v40
  %v170 = vunpack.c.l.b16 %v41
  %v171 = vunpack.c.l.b16 %v42
  %v172 = vunpack.c.l.b16 %v43
  %v173 = vunpack.c.l.b16 %v44
  %v174 = vunpack.c.l.b16 %v45
  %v175 = vunpack.c.l.b16 %v46
  %v176 = vunpack.c.l.b16 %v47
  %v177 = vunpack.c.l.b16 %v48
  %v178 = vunpack.c.l.b16 %v49
  %v179 = vunpack.c.l.b16 %v50
  %v180 = vunpack.c.l.b16 %v51
  %v181 = vunpack.c.l.b16 %v52
  %v182 = vunpack.c.l.b16 %v53
  %v183 = vunpack.c.l.b16 %v54
  %v184 = vunpack.c.l.b16 %v55
  %v185 = vunpack.c.l.b16 %v56
  %v186 = vunpack.c.l.b16 %v57
  %v187 = vunpack.c.l.b16 %v58
  %v188 = vunpack.c.l.b16 %v59
  %v189 = vunpack.c.l.b16 %v60
  %v190 = vunpack.c.l.b16 %v61
  %v191 = vunpack.c.l.b16 %v62
  %v192 = vunpack.c.l.b16 %v63
  %v193 = vunpack.c.l.b16 %v64
  %v194 = vunpack.c.l.b16 %v65
  %v195 = vunpack.c.l.b16 %v66
  %v196 = vunpack.c.l.b16 %v67
  %v197 = vunpack.c.l.b16 %v68
  %v198 = vunpack.c.l.b16 %v69
  %v199 = vunpack.c.l.b16 %v70
  %v200 = vunpack.c.l.b16 %v71
  %v201 = vunpack.c.l.b16 %v72
  %v202 = vunpack.c.l.b16 %v73
  %v203 = vunpack.c.l.b16 %v74
  %v204 = vunpack.c.l.b16 %v75
  %v205 = vunpack.c.l.b16 %v76
  %v206 = vunpack.c.l.b16 %v77
  %v207 = vunpack.c.l.b16 %v78
  %v208 = vunpack.c.l.b16 %v79
  %v209 = vunpack.c.l.b16 %v80
  %v210 = vunpack.c.l.b16 %v81
  %v211 = vpack.c.b16 %v148, %v147
  %v212 = vpack.c.b16 %v150, %v149
  %v213 = vpack.c.b16 %v152, %v151
  %v214 = vpack.c.b16 %v154, %v153
  %v215 = vpack.c.b16 %v156, %v155
  %v216 = vpack.c.b16 %v158, %v157
  %v217 = vpack.c.b16 %v160, %v159
  %v218 = vpack.c.b16 %v162, %v161
  %v219 = vpack.c.b16 %v164, %v163
  %v220 = vpack.c.b16 %v166, %v165
  %v221 = vpack.c.b16 %v168, %v167
  %v222 = vpack.c.b16 %v170, %v169
  %v223 = vpack.c.b16 %v172, %v171
  %v224 = vpack.c.b16 %v174, %v173
  %v225 = vpack.c.b16 %v176, %v175
  %v226 = vpack.c.b16 %v178, %v177
  %v227 = vpack.c.b16 %v180, %v179
  %v228 = vpack.c.b16 %v182, %v181
  %v229 = vpack.c.b16 %v184, %v183
  %v230 = vpack.c.b16 %v186, %v185
  %v231 = vpack.c.b16 %v188, %v187
  %v232 = vpack.c.b16 %v190, %v189
  %v233 = vpack.c.b16 %v192, %v191
  %v234 = vpack.c.b16 %v194, %v193
  %v235 = vpack.c.b16 %v196, %v195
  %v236 = vpack.c.b16 %v198, %v197
  %v237 = vpack.c.b16 %v200, %v199
  %v238 = vpack.c.b16 %v202, %v201
  %v239 = vpack.c.b16 %v204, %v203
  %v240 = vpack.c.b16 %v206, %v205
  %v241 = vpack.c.b16 %v208, %v207
  %v242 = vpack.c.b16 %v210, %v209
  %vm243 = vcmask 31744
  %v245 = vsel %vm243, %v211, 0
  %v248 = vsel %vm243, %v212, 0
  %v251 = vsel %vm243, %v213, 0
  %v254 = vsel %vm243, %v214, 0
  %v257 = vsel %vm243, %v215, 0
  %v260 = vsel %vm243, %v216, 0
  %v263 = vsel %vm243, %v217, 0
  %v266 = vsel %vm243, %v218, 0
  %v269 = vsel %vm243, %v219, 0
  %v272 = vsel %vm243, %v220, 0
  %v275 = vsel %vm243, %v221, 0
  %v278 = vsel %vm243, %v222, 0
  %v281 = vsel %vm243, %v223, 0
  %v284 = vsel %vm243, %v224, 0
  %v287 = vsel %vm243, %v225, 0
  %v290 = vsel %vm243, %v226, 0
  %v293 = vsel %vm243, %v227, 0
  %v296 = vsel %vm243, %v228, 0
  %v299 = vsel %vm243, %v229, 0
  %v302 = vsel %vm243, %v230, 0
  %v305 = vsel %vm243, %v231, 0
  %v308 = vsel %vm243, %v232, 0
  %v311 = vsel %vm243, %v233, 0
  %v314 = vsel %vm243, %v234, 0
  %v317 = vsel %vm243, %v235, 0
  %v320 = vsel %vm243, %v236, 0
  %v323 = vsel %vm243, %v237, 0
  %v326 = vsel %vm243, %v238, 0
  %v329 = vsel %vm243, %v239, 0
  %v332 = vsel %vm243, %v240, 0
  %v335 = vsel %vm243, %v241, 0
  %v338 = vsel %vm243, %v242, 0
  %vm340 = vcmask 1041408
  %v342 = vsel %vm340, %v82, 0
  %344 = vmatpush.bf16.msra.mxu0 0
  %345 = vmatpush.bf16.msra.mxu0 0
  %346 = vmatpush.bf16.msra.mxu0 0
  %347 = vmatpush.bf16.msra.mxu0 0
  %348 = vmatpush.bf16.msra.mxu0 0
  %349 = vmatpush.bf16.msra.mxu0 0
  %350 = vmatpush.bf16.msra.mxu0 0
  %351 = vmatpush.bf16.msra.mxu0 %v342
  %352 = vmatmul.bf16.gmra.mxu0 %v245
  %v353 = vpop.f32.mrf.mxu0
  %v354 = vadd.f32 0.0, %v353
  %v355 = vpop.f32.mrf.mxu0
  %v356 = vadd.f32 0.0, %v355
  %357 = vmatmul.bf16.gmra.mxu0 %v248
  %v358 = vpop.f32.mrf.mxu0
  %v359 = vadd.f32 0.0, %v358
  %v360 = vpop.f32.mrf.mxu0
  %v361 = vadd.f32 0.0, %v360
  %362 = vmatmul.bf16.gmra.mxu0 %v251
  %v363 = vpop.f32.mrf.mxu0
  %v364 = vadd.f32 0.0, %v363
  %v365 = vpop.f32.mrf.mxu0
  %v366 = vadd.f32 0.0, %v365
  %367 = vmatmul.bf16.gmra.mxu0 %v254
  %v368 = vpop.f32.mrf.mxu0
  %v369 = vadd.f32 0.0, %v368
  %v370 = vpop.f32.mrf.mxu0
  %v371 = vadd.f32 0.0, %v370
  %372 = vmatmul.bf16.gmra.mxu0 %v257
  %v373 = vpop.f32.mrf.mxu0
  %v374 = vadd.f32 0.0, %v373
  %v375 = vpop.f32.mrf.mxu0
  %v376 = vadd.f32 0.0, %v375
  %377 = vmatmul.bf16.gmra.mxu0 %v260
  %v378 = vpop.f32.mrf.mxu0
  %v379 = vadd.f32 0.0, %v378
  %v380 = vpop.f32.mrf.mxu0
  %v381 = vadd.f32 0.0, %v380
  %382 = vmatmul.bf16.gmra.mxu0 %v263
  %v383 = vpop.f32.mrf.mxu0
  %v384 = vadd.f32 0.0, %v383
  %v385 = vpop.f32.mrf.mxu0
  %v386 = vadd.f32 0.0, %v385
  %387 = vmatmul.bf16.gmra.mxu0 %v266
  %v388 = vpop.f32.mrf.mxu0
  %v389 = vadd.f32 0.0, %v388
  %v390 = vpop.f32.mrf.mxu0
  %v391 = vadd.f32 0.0, %v390
  %392 = vmatmul.bf16.gmra.mxu0 %v269
  %v393 = vpop.f32.mrf.mxu0
  %v394 = vadd.f32 0.0, %v393
  %v395 = vpop.f32.mrf.mxu0
  %v396 = vadd.f32 0.0, %v395
  %397 = vmatmul.bf16.gmra.mxu0 %v272
  %v398 = vpop.f32.mrf.mxu0
  %v399 = vadd.f32 0.0, %v398
  %v400 = vpop.f32.mrf.mxu0
  %v401 = vadd.f32 0.0, %v400
  %402 = vmatmul.bf16.gmra.mxu0 %v275
  %v403 = vpop.f32.mrf.mxu0
  %v404 = vadd.f32 0.0, %v403
  %v405 = vpop.f32.mrf.mxu0
  %v406 = vadd.f32 0.0, %v405
  %407 = vmatmul.bf16.gmra.mxu0 %v278
  %v408 = vpop.f32.mrf.mxu0
  %v409 = vadd.f32 0.0, %v408
  %v410 = vpop.f32.mrf.mxu0
  %v411 = vadd.f32 0.0, %v410
  %412 = vmatmul.bf16.gmra.mxu0 %v281
  %v413 = vpop.f32.mrf.mxu0
  %v414 = vadd.f32 0.0, %v413
  %v415 = vpop.f32.mrf.mxu0
  %v416 = vadd.f32 0.0, %v415
  %417 = vmatmul.bf16.gmra.mxu0 %v284
  %v418 = vpop.f32.mrf.mxu0
  %v419 = vadd.f32 0.0, %v418
  %v420 = vpop.f32.mrf.mxu0
  %v421 = vadd.f32 0.0, %v420
  %422 = vmatmul.bf16.gmra.mxu0 %v287
  %v423 = vpop.f32.mrf.mxu0
  %v424 = vadd.f32 0.0, %v423
  %v425 = vpop.f32.mrf.mxu0
  %v426 = vadd.f32 0.0, %v425
  %427 = vmatmul.bf16.gmra.mxu0 %v290
  %v428 = vpop.f32.mrf.mxu0
  %v429 = vadd.f32 0.0, %v428
  %v430 = vpop.f32.mrf.mxu0
  %v431 = vadd.f32 0.0, %v430
  %432 = vmatmul.bf16.gmra.mxu0 %v293
  %v433 = vpop.f32.mrf.mxu0
  %v434 = vadd.f32 0.0, %v433
  %v435 = vpop.f32.mrf.mxu0
  %v436 = vadd.f32 0.0, %v435
  %437 = vmatmul.bf16.gmra.mxu0 %v296
  %v438 = vpop.f32.mrf.mxu0
  %v439 = vadd.f32 0.0, %v438
  %v440 = vpop.f32.mrf.mxu0
  %v441 = vadd.f32 0.0, %v440
  %442 = vmatmul.bf16.gmra.mxu0 %v299
  %v443 = vpop.f32.mrf.mxu0
  %v444 = vadd.f32 0.0, %v443
  %v445 = vpop.f32.mrf.mxu0
  %v446 = vadd.f32 0.0, %v445
  %447 = vmatmul.bf16.gmra.mxu0 %v302
  %v448 = vpop.f32.mrf.mxu0
  %v449 = vadd.f32 0.0, %v448
  %v450 = vpop.f32.mrf.mxu0
  %v451 = vadd.f32 0.0, %v450
  %452 = vmatmul.bf16.gmra.mxu0 %v305
  %v453 = vpop.f32.mrf.mxu0
  %v454 = vadd.f32 0.0, %v453
  %v455 = vpop.f32.mrf.mxu0
  %v456 = vadd.f32 0.0, %v455
  %457 = vmatmul.bf16.gmra.mxu0 %v308
  %v458 = vpop.f32.mrf.mxu0
  %v459 = vadd.f32 0.0, %v458
  %v460 = vpop.f32.mrf.mxu0
  %v461 = vadd.f32 0.0, %v460
  %462 = vmatmul.bf16.gmra.mxu0 %v311
  %v463 = vpop.f32.mrf.mxu0
  %v464 = vadd.f32 0.0, %v463
  %v465 = vpop.f32.mrf.mxu0
  %v466 = vadd.f32 0.0, %v465
  %467 = vmatmul.bf16.gmra.mxu0 %v314
  %v468 = vpop.f32.mrf.mxu0
  %v469 = vadd.f32 0.0, %v468
  %v470 = vpop.f32.mrf.mxu0
  %v471 = vadd.f32 0.0, %v470
  %472 = vmatmul.bf16.gmra.mxu0 %v317
  %v473 = vpop.f32.mrf.mxu0
  %v474 = vadd.f32 0.0, %v473
  %v475 = vpop.f32.mrf.mxu0
  %v476 = vadd.f32 0.0, %v475
  %477 = vmatmul.bf16.gmra.mxu0 %v320
  %v478 = vpop.f32.mrf.mxu0
  %v479 = vadd.f32 0.0, %v478
  %v480 = vpop.f32.mrf.mxu0
  %v481 = vadd.f32 0.0, %v480
  %482 = vmatmul.bf16.gmra.mxu0 %v323
  %v483 = vpop.f32.mrf.mxu0
  %v484 = vadd.f32 0.0, %v483
  %v485 = vpop.f32.mrf.mxu0
  %v486 = vadd.f32 0.0, %v485
  %487 = vmatmul.bf16.gmra.mxu0 %v326
  %v488 = vpop.f32.mrf.mxu0
  %v489 = vadd.f32 0.0, %v488
  %v490 = vpop.f32.mrf.mxu0
  %v491 = vadd.f32 0.0, %v490
  %492 = vmatmul.bf16.gmra.mxu0 %v329
  %v493 = vpop.f32.mrf.mxu0
  %v494 = vadd.f32 0.0, %v493
  %v495 = vpop.f32.mrf.mxu0
  %v496 = vadd.f32 0.0, %v495
  %497 = vmatmul.bf16.gmra.mxu0 %v332
  %v498 = vpop.f32.mrf.mxu0
  %v499 = vadd.f32 0.0, %v498
  %v500 = vpop.f32.mrf.mxu0
  %v501 = vadd.f32 0.0, %v500
  %502 = vmatmul.bf16.gmra.mxu0 %v335
  %v503 = vpop.f32.mrf.mxu0
  %v504 = vadd.f32 0.0, %v503
  %v505 = vpop.f32.mrf.mxu0
  %v506 = vadd.f32 0.0, %v505
  %507 = vmatmul.bf16.gmra.mxu0 %v338
  %v508 = vpop.f32.mrf.mxu0
  %v509 = vadd.f32 0.0, %v508
  %v510 = vpop.f32.mrf.mxu0
  %v511 = vadd.f32 0.0, %v510
  %512 = vdwg.mxu0
  %v513 = vld [vmem:[%s2] sm:$0x1]
  %v515 = vperm.slane %v513, 0
  %v517 = vmul.f32 %v354, %v515
  %v518 = vmul.f32 %v356, %v515
  %v519 = vmul.f32 %v359, %v515
  %v520 = vmul.f32 %v361, %v515
  %v521 = vmul.f32 %v364, %v515
  %v522 = vmul.f32 %v366, %v515
  %v523 = vmul.f32 %v369, %v515
  %v524 = vmul.f32 %v371, %v515
  %v525 = vmul.f32 %v374, %v515
  %v526 = vmul.f32 %v376, %v515
  %v527 = vmul.f32 %v379, %v515
  %v528 = vmul.f32 %v381, %v515
  %v529 = vmul.f32 %v384, %v515
  %v530 = vmul.f32 %v386, %v515
  %v531 = vmul.f32 %v389, %v515
  %v532 = vmul.f32 %v391, %v515
  %v533 = vmul.f32 %v394, %v515
  %v534 = vmul.f32 %v396, %v515
  %v535 = vmul.f32 %v399, %v515
  %v536 = vmul.f32 %v401, %v515
  %v537 = vmul.f32 %v404, %v515
  %v538 = vmul.f32 %v406, %v515
  %v539 = vmul.f32 %v409, %v515
  %v540 = vmul.f32 %v411, %v515
  %v541 = vmul.f32 %v414, %v515
  %v542 = vmul.f32 %v416, %v515
  %v543 = vmul.f32 %v419, %v515
  %v544 = vmul.f32 %v421, %v515
  %v545 = vmul.f32 %v424, %v515
  %v546 = vmul.f32 %v426, %v515
  %v547 = vmul.f32 %v429, %v515
  %v548 = vmul.f32 %v431, %v515
  %v549 = vmul.f32 %v434, %v515
  %v550 = vmul.f32 %v436, %v515
  %v551 = vmul.f32 %v439, %v515
  %v552 = vmul.f32 %v441, %v515
  %v553 = vmul.f32 %v444, %v515
  %v554 = vmul.f32 %v446, %v515
  %v555 = vmul.f32 %v449, %v515
  %v556 = vmul.f32 %v451, %v515
  %v557 = vmul.f32 %v454, %v515
  %v558 = vmul.f32 %v456, %v515
  %v559 = vmul.f32 %v459, %v515
  %v560 = vmul.f32 %v461, %v515
  %v561 = vmul.f32 %v464, %v515
  %v562 = vmul.f32 %v466, %v515
  %v563 = vmul.f32 %v469, %v515
  %v564 = vmul.f32 %v471, %v515
  %v565 = vmul.f32 %v474, %v515
  %v566 = vmul.f32 %v476, %v515
  %v567 = vmul.f32 %v479, %v515
  %v568 = vmul.f32 %v481, %v515
  %v569 = vmul.f32 %v484, %v515
  %v570 = vmul.f32 %v486, %v515
  %v571 = vmul.f32 %v489, %v515
  %v572 = vmul.f32 %v491, %v515
  %v573 = vmul.f32 %v494, %v515
  %v574 = vmul.f32 %v496, %v515
  %v575 = vmul.f32 %v499, %v515
  %v576 = vmul.f32 %v501, %v515
  %v577 = vmul.f32 %v504, %v515
  %v578 = vmul.f32 %v506, %v515
  %v579 = vmul.f32 %v509, %v515
  %v580 = vmul.f32 %v511, %v515
  %v581 = vld [vmem:[%s3] sm:$0x1]
  %v583 = vperm.slane %v581, 0
  %v585 = vadd.f32 %v517, %v583
  %v586 = vadd.f32 %v518, %v583
  %v587 = vadd.f32 %v519, %v583
  %v588 = vadd.f32 %v520, %v583
  %v589 = vadd.f32 %v521, %v583
  %v590 = vadd.f32 %v522, %v583
  %v591 = vadd.f32 %v523, %v583
  %v592 = vadd.f32 %v524, %v583
  %v593 = vadd.f32 %v525, %v583
  %v594 = vadd.f32 %v526, %v583
  %v595 = vadd.f32 %v527, %v583
  %v596 = vadd.f32 %v528, %v583
  %v597 = vadd.f32 %v529, %v583
  %v598 = vadd.f32 %v530, %v583
  %v599 = vadd.f32 %v531, %v583
  %v600 = vadd.f32 %v532, %v583
  %v601 = vadd.f32 %v533, %v583
  %v602 = vadd.f32 %v534, %v583
  %v603 = vadd.f32 %v535, %v583
  %v604 = vadd.f32 %v536, %v583
  %v605 = vadd.f32 %v537, %v583
  %v606 = vadd.f32 %v538, %v583
  %v607 = vadd.f32 %v539, %v583
  %v608 = vadd.f32 %v540, %v583
  %v609 = vadd.f32 %v541, %v583
  %v610 = vadd.f32 %v542, %v583
  %v611 = vadd.f32 %v543, %v583
  %v612 = vadd.f32 %v544, %v583
  %v613 = vadd.f32 %v545, %v583
  %v614 = vadd.f32 %v546, %v583
  %v615 = vadd.f32 %v547, %v583
  %v616 = vadd.f32 %v548, %v583
  %v617 = vadd.f32 %v549, %v583
  %v618 = vadd.f32 %v550, %v583
  %v619 = vadd.f32 %v551, %v583
  %v620 = vadd.f32 %v552, %v583
  %v621 = vadd.f32 %v553, %v583
  %v622 = vadd.f32 %v554, %v583
  %v623 = vadd.f32 %v555, %v583
  %v624 = vadd.f32 %v556, %v583
  %v625 = vadd.f32 %v557, %v583
  %v626 = vadd.f32 %v558, %v583
  %v627 = vadd.f32 %v559, %v583
  %v628 = vadd.f32 %v560, %v583
  %v629 = vadd.f32 %v561, %v583
  %v630 = vadd.f32 %v562, %v583
  %v631 = vadd.f32 %v563, %v583
  %v632 = vadd.f32 %v564, %v583
  %v633 = vadd.f32 %v565, %v583
  %v634 = vadd.f32 %v566, %v583
  %v635 = vadd.f32 %v567, %v583
  %v636 = vadd.f32 %v568, %v583
  %v637 = vadd.f32 %v569, %v583
  %v638 = vadd.f32 %v570, %v583
  %v639 = vadd.f32 %v571, %v583
  %v640 = vadd.f32 %v572, %v583
  %v641 = vadd.f32 %v573, %v583
  %v642 = vadd.f32 %v574, %v583
  %v643 = vadd.f32 %v575, %v583
  %v644 = vadd.f32 %v576, %v583
  %v645 = vadd.f32 %v577, %v583
  %v646 = vadd.f32 %v578, %v583
  %v647 = vadd.f32 %v579, %v583
  %v648 = vadd.f32 %v580, %v583
  %v649 = vmax.f32 %v585, 0.0
  %v650 = vmax.f32 %v586, 0.0
  %v651 = vmax.f32 %v587, 0.0
  %v652 = vmax.f32 %v588, 0.0
  %v653 = vmax.f32 %v589, 0.0
  %v654 = vmax.f32 %v590, 0.0
  %v655 = vmax.f32 %v591, 0.0
  %v656 = vmax.f32 %v592, 0.0
  %v657 = vmax.f32 %v593, 0.0
  %v658 = vmax.f32 %v594, 0.0
  %v659 = vmax.f32 %v595, 0.0
  %v660 = vmax.f32 %v596, 0.0
  %v661 = vmax.f32 %v597, 0.0
  %v662 = vmax.f32 %v598, 0.0
  %v663 = vmax.f32 %v599, 0.0
  %v664 = vmax.f32 %v600, 0.0
  %v665 = vmax.f32 %v601, 0.0
  %v666 = vmax.f32 %v602, 0.0
  %v667 = vmax.f32 %v603, 0.0
  %v668 = vmax.f32 %v604, 0.0
  %v669 = vmax.f32 %v605, 0.0
  %v670 = vmax.f32 %v606, 0.0
  %v671 = vmax.f32 %v607, 0.0
  %v672 = vmax.f32 %v608, 0.0
  %v673 = vmax.f32 %v609, 0.0
  %v674 = vmax.f32 %v610, 0.0
  %v675 = vmax.f32 %v611, 0.0
  %v676 = vmax.f32 %v612, 0.0
  %v677 = vmax.f32 %v613, 0.0
  %v678 = vmax.f32 %v614, 0.0
  %v679 = vmax.f32 %v615, 0.0
  %v680 = vmax.f32 %v616, 0.0
  %v681 = vmax.f32 %v617, 0.0
  %v682 = vmax.f32 %v618, 0.0
  %v683 = vmax.f32 %v619, 0.0
  %v684 = vmax.f32 %v620, 0.0
  %v685 = vmax.f32 %v621, 0.0
  %v686 = vmax.f32 %v622, 0.0
  %v687 = vmax.f32 %v623, 0.0
  %v688 = vmax.f32 %v624, 0.0
  %v689 = vmax.f32 %v625, 0.0
  %v690 = vmax.f32 %v626, 0.0
  %v691 = vmax.f32 %v627, 0.0
  %v692 = vmax.f32 %v628, 0.0
  %v693 = vmax.f32 %v629, 0.0
  %v694 = vmax.f32 %v630, 0.0
  %v695 = vmax.f32 %v631, 0.0
  %v696 = vmax.f32 %v632, 0.0
  %v697 = vmax.f32 %v633, 0.0
  %v698 = vmax.f32 %v634, 0.0
  %v699 = vmax.f32 %v635, 0.0
  %v700 = vmax.f32 %v636, 0.0
  %v701 = vmax.f32 %v637, 0.0
  %v702 = vmax.f32 %v638, 0.0
  %v703 = vmax.f32 %v639, 0.0
  %v704 = vmax.f32 %v640, 0.0
  %v705 = vmax.f32 %v641, 0.0
  %v706 = vmax.f32 %v642, 0.0
  %v707 = vmax.f32 %v643, 0.0
  %v708 = vmax.f32 %v644, 0.0
  %v709 = vmax.f32 %v645, 0.0
  %v710 = vmax.f32 %v646, 0.0
  %v711 = vmax.f32 %v647, 0.0
  %v712 = vmax.f32 %v648, 0.0
  %v713 = vpack.c.bf16 %v649, %v649
  %v714 = vpack.c.bf16 %v650, %v650
  %v715 = vpack.c.bf16 %v651, %v651
  %v716 = vpack.c.bf16 %v652, %v652
  %v717 = vpack.c.bf16 %v653, %v653
  %v718 = vpack.c.bf16 %v654, %v654
  %v719 = vpack.c.bf16 %v655, %v655
  %v720 = vpack.c.bf16 %v656, %v656
  %v721 = vpack.c.bf16 %v657, %v657
  %v722 = vpack.c.bf16 %v658, %v658
  %v723 = vpack.c.bf16 %v659, %v659
  %v724 = vpack.c.bf16 %v660, %v660
  %v725 = vpack.c.bf16 %v661, %v661
  %v726 = vpack.c.bf16 %v662, %v662
  %v727 = vpack.c.bf16 %v663, %v663
  %v728 = vpack.c.bf16 %v664, %v664
  %v729 = vpack.c.bf16 %v665, %v665
  %v730 = vpack.c.bf16 %v666, %v666
  %v731 = vpack.c.bf16 %v667, %v667
  %v732 = vpack.c.bf16 %v668, %v668
  %v733 = vpack.c.bf16 %v669, %v669
  %v734 = vpack.c.bf16 %v670, %v670
  %v735 = vpack.c.bf16 %v671, %v671
  %v736 = vpack.c.bf16 %v672, %v672
  %v737 = vpack.c.bf16 %v673, %v673
  %v738 = vpack.c.bf16 %v674, %v674
  %v739 = vpack.c.bf16 %v675, %v675
  %v740 = vpack.c.bf16 %v676, %v676
  %v741 = vpack.c.bf16 %v677, %v677
  %v742 = vpack.c.bf16 %v678, %v678
  %v743 = vpack.c.bf16 %v679, %v679
  %v744 = vpack.c.bf16 %v680, %v680
  %v745 = vpack.c.bf16 %v681, %v681
  %v746 = vpack.c.bf16 %v682, %v682
  %v747 = vpack.c.bf16 %v683, %v683
  %v748 = vpack.c.bf16 %v684, %v684
  %v749 = vpack.c.bf16 %v685, %v685
  %v750 = vpack.c.bf16 %v686, %v686
  %v751 = vpack.c.bf16 %v687, %v687
  %v752 = vpack.c.bf16 %v688, %v688
  %v753 = vpack.c.bf16 %v689, %v689
  %v754 = vpack.c.bf16 %v690, %v690
  %v755 = vpack.c.bf16 %v691, %v691
  %v756 = vpack.c.bf16 %v692, %v692
  %v757 = vpack.c.bf16 %v693, %v693
  %v758 = vpack.c.bf16 %v694, %v694
  %v759 = vpack.c.bf16 %v695, %v695
  %v760 = vpack.c.bf16 %v696, %v696
  %v761 = vpack.c.bf16 %v697, %v697
  %v762 = vpack.c.bf16 %v698, %v698
  %v763 = vpack.c.bf16 %v699, %v699
  %v764 = vpack.c.bf16 %v700, %v700
  %v765 = vpack.c.bf16 %v701, %v701
  %v766 = vpack.c.bf16 %v702, %v702
  %v767 = vpack.c.bf16 %v703, %v703
  %v768 = vpack.c.bf16 %v704, %v704
  %v769 = vpack.c.bf16 %v705, %v705
  %v770 = vpack.c.bf16 %v706, %v706
  %v771 = vpack.c.bf16 %v707, %v707
  %v772 = vpack.c.bf16 %v708, %v708
  %v773 = vpack.c.bf16 %v709, %v709
  %v774 = vpack.c.bf16 %v710, %v710
  %v775 = vpack.c.bf16 %v711, %v711
  %v776 = vpack.c.bf16 %v712, %v712
  %vm777 = vcmask 27648
  %778 = vst.msk [vmem:[%s4] sm:$0xf] %vm777, %v713
  %779 = vst.msk [vmem:[%s4 + $0x4] sm:$0xf] %vm777, %v714
  %780 = vst.msk [vmem:[%s4 + $0x8] sm:$0xf] %vm777, %v715
  %781 = vst.msk [vmem:[%s4 + $0xc] sm:$0xf] %vm777, %v716
  %782 = vst.msk [vmem:[%s4 + $0x10] sm:$0xf] %vm777, %v717
  %783 = vst.msk [vmem:[%s4 + $0x14] sm:$0xf] %vm777, %v718
  %784 = vst.msk [vmem:[%s4 + $0x18] sm:$0xf] %vm777, %v719
  %785 = vst.msk [vmem:[%s4 + $0x1c] sm:$0xf] %vm777, %v720
  %786 = vst.msk [vmem:[%s4 + $0x20] sm:$0xf] %vm777, %v721
  %787 = vst.msk [vmem:[%s4 + $0x24] sm:$0xf] %vm777, %v722
  %788 = vst.msk [vmem:[%s4 + $0x28] sm:$0xf] %vm777, %v723
  %789 = vst.msk [vmem:[%s4 + $0x2c] sm:$0xf] %vm777, %v724
  %790 = vst.msk [vmem:[%s4 + $0x30] sm:$0xf] %vm777, %v725
  %791 = vst.msk [vmem:[%s4 + $0x34] sm:$0xf] %vm777, %v726
  %792 = vst.msk [vmem:[%s4 + $0x38] sm:$0xf] %vm777, %v727
  %793 = vst.msk [vmem:[%s4 + $0x3c] sm:$0xf] %vm777, %v728
  %794 = vst.msk [vmem:[%s4 + $0x40] sm:$0xf] %vm777, %v729
  %795 = vst.msk [vmem:[%s4 + $0x44] sm:$0xf] %vm777, %v730
  %796 = vst.msk [vmem:[%s4 + $0x48] sm:$0xf] %vm777, %v731
  %797 = vst.msk [vmem:[%s4 + $0x4c] sm:$0xf] %vm777, %v732
  %798 = vst.msk [vmem:[%s4 + $0x50] sm:$0xf] %vm777, %v733
  %799 = vst.msk [vmem:[%s4 + $0x54] sm:$0xf] %vm777, %v734
  %800 = vst.msk [vmem:[%s4 + $0x58] sm:$0xf] %vm777, %v735
  %801 = vst.msk [vmem:[%s4 + $0x5c] sm:$0xf] %vm777, %v736
  %802 = vst.msk [vmem:[%s4 + $0x60] sm:$0xf] %vm777, %v737
  %803 = vst.msk [vmem:[%s4 + $0x64] sm:$0xf] %vm777, %v738
  %804 = vst.msk [vmem:[%s4 + $0x68] sm:$0xf] %vm777, %v739
  %805 = vst.msk [vmem:[%s4 + $0x6c] sm:$0xf] %vm777, %v740
  %806 = vst.msk [vmem:[%s4 + $0x70] sm:$0xf] %vm777, %v741
  %807 = vst.msk [vmem:[%s4 + $0x74] sm:$0xf] %vm777, %v742
  %808 = vst.msk [vmem:[%s4 + $0x78] sm:$0xf] %vm777, %v743
  %809 = vst.msk [vmem:[%s4 + $0x7c] sm:$0xf] %vm777, %v744
  %810 = vst.msk [vmem:[%s4 + $0x80] sm:$0xf] %vm777, %v745
  %811 = vst.msk [vmem:[%s4 + $0x84] sm:$0xf] %vm777, %v746
  %812 = vst.msk [vmem:[%s4 + $0x88] sm:$0xf] %vm777, %v747
  %813 = vst.msk [vmem:[%s4 + $0x8c] sm:$0xf] %vm777, %v748
  %814 = vst.msk [vmem:[%s4 + $0x90] sm:$0xf] %vm777, %v749
  %815 = vst.msk [vmem:[%s4 + $0x94] sm:$0xf] %vm777, %v750
  %816 = vst.msk [vmem:[%s4 + $0x98] sm:$0xf] %vm777, %v751
  %817 = vst.msk [vmem:[%s4 + $0x9c] sm:$0xf] %vm777, %v752
  %818 = vst.msk [vmem:[%s4 + $0xa0] sm:$0xf] %vm777, %v753
  %819 = vst.msk [vmem:[%s4 + $0xa4] sm:$0xf] %vm777, %v754
  %820 = vst.msk [vmem:[%s4 + $0xa8] sm:$0xf] %vm777, %v755
  %821 = vst.msk [vmem:[%s4 + $0xac] sm:$0xf] %vm777, %v756
  %822 = vst.msk [vmem:[%s4 + $0xb0] sm:$0xf] %vm777, %v757
  %823 = vst.msk [vmem:[%s4 + $0xb4] sm:$0xf] %vm777, %v758
  %824 = vst.msk [vmem:[%s4 + $0xb8] sm:$0xf] %vm777, %v759
  %825 = vst.msk [vmem:[%s4 + $0xbc] sm:$0xf] %vm777, %v760
  %826 = vst.msk [vmem:[%s4 + $0xc0] sm:$0xf] %vm777, %v761
  %827 = vst.msk [vmem:[%s4 + $0xc4] sm:$0xf] %vm777, %v762
  %828 = vst.msk [vmem:[%s4 + $0xc8] sm:$0xf] %vm777, %v763
  %829 = vst.msk [vmem:[%s4 + $0xcc] sm:$0xf] %vm777, %v764
  %830 = vst.msk [vmem:[%s4 + $0xd0] sm:$0xf] %vm777, %v765
  %831 = vst.msk [vmem:[%s4 + $0xd4] sm:$0xf] %vm777, %v766
  %832 = vst.msk [vmem:[%s4 + $0xd8] sm:$0xf] %vm777, %v767
  %833 = vst.msk [vmem:[%s4 + $0xdc] sm:$0xf] %vm777, %v768
  %834 = vst.msk [vmem:[%s4 + $0xe0] sm:$0xf] %vm777, %v769
  %835 = vst.msk [vmem:[%s4 + $0xe4] sm:$0xf] %vm777, %v770
  %836 = vst.msk [vmem:[%s4 + $0xe8] sm:$0xf] %vm777, %v771
  %837 = vst.msk [vmem:[%s4 + $0xec] sm:$0xf] %vm777, %v772
  %838 = vst.msk [vmem:[%s4 + $0xf0] sm:$0xf] %vm777, %v773
  %839 = vst.msk [vmem:[%s4 + $0xf4] sm:$0xf] %vm777, %v774
  %840 = vst.msk [vmem:[%s4 + $0xf8] sm:$0xf] %vm777, %v775
  %841 = vst.msk [vmem:[%s4 + $0xfc] sm:$0xf] %vm777, %v776
  // Predicated region
  $region18: #{tpu_custom_call.1} parent=0 // pred_check
    _
  $region19: #{tpu_custom_call.1} parent=0 // pred_check_branch
    %843 = sbr.rel (0) target = $region21
  $region20: #{tpu_custom_call.1} parent=0 // pred_region
    _
  $region21: #{tpu_custom_call.1} parent=0 // pred_fallthru
    _
  // Predicated region
  $region22: #{tpu_custom_call.1} parent=0 // pred_check
    _
  $region23: #{tpu_custom_call.1} parent=0 // pred_check_branch
    %845 = sbr.rel (0) target = $region25
  $region24: #{tpu_custom_call.1} parent=0 // pred_region
    _
  $region25: #{tpu_custom_call.1} parent=0 // pred_fallthru
    _

</llo_original>
